<compile_context>
chip_gen: v7x
topology: tpu7x:2x2x1
jax: 0.10.0
libtpu: 0.0.40
codegen_flags: <defaults>
</compile_context>

<pallas_src>
import jax
import jax.numpy as jnp
from jax.experimental import pallas as pl
from jax.experimental.pallas import tpu as pltpu

EPS = 1e-6
LANES = 128
ACC_ROWS = 8            # height of the resident per-core accumulator block
CHUNK_ROWS_CAP = 512    # in-kernel fold chunk (rows); keeps temps ~1 MiB


def _tpu_config():
    """Best-effort (tensorcores_per_chip, vmem_bytes_per_core).

    Falls back to the most conservative assumption (1 TensorCore, 64 MiB VMEM,
    i.e. v7x-safe) when the query is unavailable.
    """
    cores, vmem_cap = 1, 64 * 1024 * 1024
    try:
        info = pltpu.get_tpu_info()
        v = getattr(info, "vmem_capacity_bytes", None)
        if v:
            vmem_cap = int(v)
        for attr in ("num_tensorcores", "tensorcores_per_chip",
                     "num_cores_per_chip"):
            nc = getattr(info, attr, None)
            if nc:
                cores = max(1, min(2, int(nc)))
                break
    except Exception:
        pass
    return cores, vmem_cap


def _pick_chunk_rows(tile_rows, row_align):
    """Largest divisor of tile_rows that is <= CHUNK_ROWS_CAP and a multiple of
    row_align (row_align itself always qualifies)."""
    best = row_align
    c = row_align
    while c <= min(CHUNK_ROWS_CAP, tile_rows):
        if tile_rows % c == 0:
            best = c
        c += row_align
    return best


def _make_kernel(rows, tile_rows, chunk_rows, steps_per_core, needs_mask):
    n_chunks = tile_rows // chunk_rows

    def kernel(x_ref, y_ref, o_ref):
        c = pl.program_id(0)
        i = pl.program_id(1)

        # Zero the resident per-core accumulator block on this core's 1st step.
        @pl.when(i == 0)
        def _():
            o_ref[...] = jnp.zeros_like(o_ref)

        # Logical (un-clamped) first row of this tile; used both to detect the
        # boundary tile and to mask rows past the valid range (clamped
        # redundant tiles have row0 >= rows and contribute exactly zero).
        row0 = (c * steps_per_core + i) * tile_rows

        def fold(masked):
            def run():
                @pl.loop(0, n_chunks)
                def _(j):
                    r = pl.multiple_of(j * chunk_rows, chunk_rows)
                    xs = x_ref[pl.ds(r, chunk_rows), :].astype(jnp.float32)
                    ys = y_ref[pl.ds(r, chunk_rows), :].astype(jnp.float32)
                    d = xs - ys
                    e = jnp.sqrt(d * d + jnp.float32(EPS))
                    if masked:
                        gid = row0 + r + jax.lax.broadcasted_iota(
                            jnp.int32, (chunk_rows, LANES), 0)
                        e = jnp.where(gid < rows, e, 0.0)
                    # (chunk_rows,128) -> (8,128) with elementwise VPU adds,
                    # accumulated into the resident output block.
                    o_ref[...] += jnp.sum(
                        e.reshape(chunk_rows // ACC_ROWS, ACC_ROWS, LANES),
                        axis=0)
            return run

        if needs_mask:
            boundary = row0 + tile_rows > rows
            pl.when(boundary)(fold(True))                       # boundary tile
            pl.when(jnp.logical_not(boundary))(fold(False))     # interior fast path
        else:
            fold(False)()

    return kernel


def l1_charbonnier_loss(x, y):
    assert x.shape == y.shape, "x and y must have the same shape"
    n = x.size

    xf = jnp.ravel(x)   # native dtype; cast to f32 inside the kernel
    yf = jnp.ravel(y)

    itemsize = max(jnp.dtype(x.dtype).itemsize, jnp.dtype(y.dtype).itemsize)
    # 8 rows for 32-bit, 16 for bf16/fp16, 32 for int8/fp8 (sublane packing).
    row_align = max(ACC_ROWS, 32 // max(1, itemsize))
    align_elems = row_align * LANES

    n_main = (n // align_elems) * align_elems
    tail = n - n_main

    total = jnp.float32(0.0)
    if tail:
        # Tiny (< align_elems) tail handled in plain jnp: avoids a full-array
        # pad copy through HBM for misaligned sizes.
        dt = xf[n_main:].astype(jnp.float32) - yf[n_main:].astype(jnp.float32)
        total = total + jnp.sum(jnp.sqrt(dt * dt + jnp.float32(EPS)))
    if n_main == 0:
        return total

    rows = n_main // LANES
    x2 = xf[:n_main].reshape(rows, LANES)   # no copy when tail == 0
    y2 = yf[:n_main].reshape(rows, LANES)

    num_cores, vmem_cap = _tpu_config()
    if vmem_cap >= 100 * 1024 * 1024:       # v5e / v6e: 128 MiB VMEM per core
        max_tile_rows = 16384               # 8 MiB per f32 input tile
        vmem_limit = 64 * 1024 * 1024
    else:                                   # v7x (64 MiB/core) or unknown
        max_tile_rows = 12288               # 6 MiB per f32 input tile
        vmem_limit = 48 * 1024 * 1024

    tile_rows = min(max_tile_rows, rows)    # always a multiple of row_align
    steps_total = pl.cdiv(rows, tile_rows)
    num_cores = max(1, min(num_cores, steps_total))
    steps_per_core = pl.cdiv(steps_total, num_cores)
    last_block = steps_total - 1
    chunk_rows = _pick_chunk_rows(tile_rows, row_align)

    # Masking only needed for a partial last row-tile or an uneven core split.
    needs_mask = (rows % tile_rows != 0) or (steps_total % num_cores != 0)

    def in_map(c, i):
        # Clamp so every DMA stays inside the array; clamped (redundant) tiles
        # and out-of-range rows are masked inside the kernel.
        return (jnp.minimum(c * steps_per_core + i, last_block), 0)

    kernel = _make_kernel(rows, tile_rows, chunk_rows, steps_per_core,
                          needs_mask)

    def call(lead_sem):
        return pl.pallas_call(
            kernel,
            out_shape=jax.ShapeDtypeStruct((num_cores * ACC_ROWS, LANES),
                                           jnp.float32),
            grid_spec=pltpu.PrefetchScalarGridSpec(
                num_scalar_prefetch=0,
                grid=(num_cores, steps_per_core),
                in_specs=[
                    pl.BlockSpec((tile_rows, LANES), in_map),
                    pl.BlockSpec((tile_rows, LANES), in_map),
                ],
                out_specs=pl.BlockSpec((ACC_ROWS, LANES), lambda c, i: (c, 0)),
            ),
            compiler_params=pltpu.CompilerParams(
                dimension_semantics=(lead_sem, pltpu.ARBITRARY),
                vmem_limit_bytes=vmem_limit,
            ),
            cost_estimate=pl.CostEstimate(
                flops=4 * n_main,
                transcendentals=n_main,
                bytes_accessed=(x2.size * x2.dtype.itemsize
                                + y2.size * y2.dtype.itemsize
                                + num_cores * ACC_ROWS * LANES * 4),
            ),
        )(x2, y2)

    if num_cores > 1:
        lead_options = (pltpu.CORE_PARALLEL, pltpu.PARALLEL)
    else:
        lead_options = (pltpu.ARBITRARY,)

    out, last_err = None, None
    for lead in lead_options:
        try:
            out = call(lead)
            break
        except Exception as e:   # fall back if CORE_PARALLEL is unsupported
            last_err = e
    if out is None:
        raise last_err

    # Tiny final reduction of the per-core (8, 128) partial sums.
    return total + jnp.sum(out)


if __name__ == "__main__":
    key = jax.random.PRNGKey(0)
    kx, ky = jax.random.split(key)
    # Small NCHW shapes, consistent with a typical image-restoration loss.
    x = jax.random.normal(kx, (2, 4, 16, 16), dtype=jnp.float32)
    y = jax.random.normal(ky, (2, 4, 16, 16), dtype=jnp.float32)

    loss = jax.block_until_ready(l1_charbonnier_loss(x, y))
    ref = jnp.sum(jnp.sqrt((x - y) * (x - y) + EPS))
    assert jnp.allclose(loss, ref, rtol=1e-5, atol=1e-5), (loss, ref)

    # Misaligned size exercises the aligned-prefix + jnp-tail path (no pad copy).
    kx2, ky2 = jax.random.split(ky)
    xm = jax.random.normal(kx2, (3, 5, 7, 13), dtype=jnp.float32)
    ym = jax.random.normal(ky2, (3, 5, 7, 13), dtype=jnp.float32)
    loss2 = jax.block_until_ready(l1_charbonnier_loss(xm, ym))
    ref2 = jnp.sum(jnp.sqrt((xm - ym) * (xm - ym) + EPS))
    assert jnp.allclose(loss2, ref2, rtol=1e-5, atol=1e-5), (loss2, ref2)

    print("KERNEL_OK")
</pallas_src>

<mosaic_0001>
module attributes {stable_mosaic.version = 11 : i64} {
  func.func @kernel(%arg0: i32, %arg1: i32, %arg2: memref<16x128xf32, #tpu.memory_space<vmem>>, %arg3: memref<16x128xf32, #tpu.memory_space<vmem>>, %arg4: memref<8x128xf32, #tpu.memory_space<vmem>>) attributes {dimension_semantics = [#tpu.dimension_semantics<arbitrary>, #tpu.dimension_semantics<arbitrary>], iteration_bounds = array<i64: 1, 1>, scalar_prefetch = 0 : i64, scratch_operands = 0 : i64, tpu.core_type = #tpu.core_type<tc>, window_params = [{transform_indices = @transform_0, window_bounds = array<i64: 16, 128>}, {transform_indices = @transform_1, window_bounds = array<i64: 16, 128>}, {transform_indices = @transform_2, window_bounds = array<i64: 8, 128>}]} {
    %c0_i32 = arith.constant 0 : i32
    %0 = arith.cmpi eq, %arg1, %c0_i32 : i32
    %1 = arith.extui %0 : i1 to i32
    %c0_i32_0 = arith.constant 0 : i32
    %2 = arith.cmpi ne, %1, %c0_i32_0 : i32
    scf.if %2 {
      %cst_10 = arith.constant 0.000000e+00 : f32
      %21 = vector.broadcast %cst_10 : f32 to vector<8x128xf32>
      %c0_11 = arith.constant 0 : index
      %c0_12 = arith.constant 0 : index
      %22 = vector.load %arg4[%c0_11, %c0_12] : memref<8x128xf32, #tpu.memory_space<vmem>>, vector<8x128xf32>
      tpu.vector_store %arg4[%c0_11, %c0_12], %21 {strides = array<i32>} : memref<8x128xf32, #tpu.memory_space<vmem>>, vector<8x128xf32>,
    } else {
    }
    %c0_i32_1 = arith.constant 0 : i32
    %c1_i32 = arith.constant 1 : i32
    %3 = arith.muli %c0_i32_1, %c1_i32 : i32
    %c0_i32_2 = arith.constant 0 : i32
    %4 = arith.addi %c0_i32_2, %3 : i32
    %c16_i32 = arith.constant 16 : i32
    %5 = arith.muli %4, %c16_i32 : i32
    %6 = tpu.assume_multiple %5, 16 : i32
    %7 = arith.index_cast %6 : i32 to index
    %c0 = arith.constant 0 : index
    %8 = vector.load %arg2[%7, %c0] : memref<16x128xf32, #tpu.memory_space<vmem>>, vector<16x128xf32>
    %9 = arith.index_cast %6 : i32 to index
    %c0_3 = arith.constant 0 : index
    %10 = vector.load %arg3[%9, %c0_3] : memref<16x128xf32, #tpu.memory_space<vmem>>, vector<16x128xf32>
    %11 = arith.subf %8, %10 : vector<16x128xf32>
    %12 = arith.mulf %11, %11 : vector<16x128xf32>
    %cst = arith.constant 9.99999997E-7 : f32
    %13 = vector.broadcast %cst : f32 to vector<16x128xf32>
    %14 = arith.addf %12, %13 : vector<16x128xf32>
    %15 = math.sqrt %14 : vector<16x128xf32>
    %c0_4 = arith.constant 0 : index
    %c0_5 = arith.constant 0 : index
    %16 = vector.load %arg4[%c0_4, %c0_5] : memref<8x128xf32, #tpu.memory_space<vmem>>, vector<8x128xf32>
    %17 = vector.shape_cast %15 : vector<16x128xf32> to vector<2x8x128xf32>
    %cst_6 = arith.constant dense<0.000000e+00> : vector<8x128xf32>
    %18 = vector.multi_reduction <add>, %17, %cst_6 [0] : vector<2x8x128xf32> to vector<8x128xf32>
    %19 = arith.addf %16, %18 : vector<8x128xf32>
    %c0_7 = arith.constant 0 : index
    %c0_8 = arith.constant 0 : index
    %20 = vector.load %arg4[%c0_7, %c0_8] : memref<8x128xf32, #tpu.memory_space<vmem>>, vector<8x128xf32>
    tpu.vector_store %arg4[%c0_7, %c0_8], %19 {strides = array<i32>} : memref<8x128xf32, #tpu.memory_space<vmem>>, vector<8x128xf32>,
    %c1_i32_9 = arith.constant 1 : i32
    return
  }
  func.func @transform_0(%arg0: i32, %arg1: i32) -> (i32, i32) {
    %c1_i32 = arith.constant 1 : i32
    %0 = arith.muli %arg0, %c1_i32 : i32
    %1 = arith.addi %0, %arg1 : i32
    %c0_i32 = arith.constant 0 : i32
    %2 = arith.minsi %1, %c0_i32 : i32
    %c0_i32_0 = arith.constant 0 : i32
    %c0_i32_1 = arith.constant 0 : i32
    return %2, %c0_i32_0 : i32, i32
  }
  func.func @transform_1(%arg0: i32, %arg1: i32) -> (i32, i32) {
    %c1_i32 = arith.constant 1 : i32
    %0 = arith.muli %arg0, %c1_i32 : i32
    %1 = arith.addi %0, %arg1 : i32
    %c0_i32 = arith.constant 0 : i32
    %2 = arith.minsi %1, %c0_i32 : i32
    %c0_i32_0 = arith.constant 0 : i32
    %c0_i32_1 = arith.constant 0 : i32
    return %2, %c0_i32_0 : i32, i32
  }
  func.func @transform_2(%arg0: i32, %arg1: i32) -> (i32, i32) {
    %c0_i32 = arith.constant 0 : i32
    %c0_i32_0 = arith.constant 0 : i32
    return %arg0, %c0_i32 : i32, i32
  }
}

</mosaic_0001>

<llo_original>
// kernel: tpu_custom_call.1
$region0: #{tpu_custom_call.1}
  #allocation0 [shape = 'u32[]', space=smem, size = 0x4, offset = 0x4, fixed_abs, tag = 'smem constant byte address 0x4 - core index']
  #allocation1 [shape = 'u32[144,128]{1,0:T(1,128)}', space=vmem, size = 0x12000, scoped, tag = 'internal scratch']
  %s0 = inlined_call_operand.hbm [shape: f32[16,128], index: 0, kind: input, shape index: {}]
  %s1 = inlined_call_operand.hbm [shape: f32[16,128], index: 1, kind: input, shape index: {}]
  %s2 = inlined_call_operand.hbm [shape: f32[8,128], index: 2, kind: output, shape index: {}]
  %s3 = sld [smem:[#allocation0]]
  $region30: #{tpu_custom_call.1} parent=0
    _
  %s5 = ssub.s32 1, %s3
  %s6 = scalar_select 0, %s5, %s3
  $region1: #{tpu_custom_call.1} parent=0
    #allocation2 [shape = 'u8[8192]{0}', space=vmem, size = 0x2000, scoped, tag = 'input window, operand 0, single buffered']
    #allocation3 [shape = 's32[1]{0}', space=sflag, size = 0x4, scoped, tag = 'scoped memory for tpu_custom_call.1']
    #allocation4 [shape = 's32[1]{0}', space=sflag, size = 0x4, scoped, tag = 'scoped memory for tpu_custom_call.1']
    #allocation5 [shape = 'u8[8192]{0}', space=vmem, size = 0x2000, scoped, tag = 'input window, operand 1, single buffered']
    #allocation6 [shape = 's32[1]{0}', space=sflag, size = 0x4, scoped, tag = 'scoped memory for tpu_custom_call.1']
    #allocation7 [shape = 'u8[4096]{0}', space=vmem, size = 0x1000, scoped, tag = 'output window, operand 0, single buffered']
    %7 = vsyncpa [#allocation3], 0
    %8 = vsyncpa [#allocation6], 0
    %9 = vsyncpa [#allocation4], 0
    // Predicated region
    $region2: #{tpu_custom_call.1} parent=1 // pred_check
      _
    $region3: #{tpu_custom_call.1} parent=1 // pred_check_branch
      %11 = sbr.rel (0) target = $region5
    $region4: #{tpu_custom_call.1} parent=1 // pred_region
      %s12 = sadd.s32 0, 0
      %p13 = scmp.lt.s32.totalorder %s12, 0
      %s14 = scalar_select %p13, %s12, 0
      %s15 = smul.u32 2, %s14
      %s17 = ssub.s32 256, 256
      %18 = vsyncadd [#allocation3], %s17
      %s19 = smul.addr %s15, 128
      %s20 = scalar_lea.hbm %s0, %s19
      %s21 = sshll.u32 [#allocation2], 4
      %s22 = int_to_ptr.vmem [resolvable:$true] %s21
      %27 = dma.hbm_to_vmem [thread:$0]  %s20, 256, %s22, [#allocation3], 128, 128, 8
    $region5: #{tpu_custom_call.1} parent=1 // pred_fallthru
      _
    // Predicated region
    $region6: #{tpu_custom_call.1} parent=1 // pred_check
      _
    $region7: #{tpu_custom_call.1} parent=1 // pred_check_branch
      %29 = sbr.rel (0) target = $region9
    $region8: #{tpu_custom_call.1} parent=1 // pred_region
      %s30 = sadd.s32 0, 0
      %p31 = scmp.lt.s32.totalorder %s30, 0
      %s32 = scalar_select %p31, %s30, 0
      %s33 = smul.u32 2, %s32
      %s35 = ssub.s32 256, 256
      %36 = vsyncadd [#allocation6], %s35
      %s37 = smul.addr %s33, 128
      %s38 = scalar_lea.hbm %s1, %s37
      %s39 = sshll.u32 [#allocation5], 4
      %s40 = int_to_ptr.vmem [resolvable:$true] %s39
      %45 = dma.hbm_to_vmem [thread:$0]  %s38, 256, %s40, [#allocation6], 128, 128, 8
    $region9: #{tpu_custom_call.1} parent=1 // pred_fallthru
      _
    // Predicated region
    $region10: #{tpu_custom_call.1} parent=1 // pred_check
      _
    $region11: #{tpu_custom_call.1} parent=1 // pred_check_branch
      %47 = sbr.rel (0) target = $region13
    $region12: #{tpu_custom_call.1} parent=1 // pred_region
      %48 = dma.done [#allocation3], 256
    $region13: #{tpu_custom_call.1} parent=1 // pred_fallthru
      _
    // Predicated region
    $region14: #{tpu_custom_call.1} parent=1 // pred_check
      _
    $region15: #{tpu_custom_call.1} parent=1 // pred_check_branch
      %50 = sbr.rel (0) target = $region17
    $region16: #{tpu_custom_call.1} parent=1 // pred_region
      %51 = dma.done [#allocation6], 256
    $region17: #{tpu_custom_call.1} parent=1 // pred_fallthru
      _
    %s52 = sadd.s32 0, 0
    %p53 = scmp.lt.s32.totalorder %s52, 0
    %s54 = scalar_select %p53, %s52, 0
    %s55 = smul.u32 2, %s54
    %s56 = sadd.s32 0, 0
    %p57 = scmp.lt.s32.totalorder %s56, 0
    %s58 = scalar_select %p57, %s56, 0
    %s59 = smul.u32 2, %s58
    %p60 = scmp.eq.s32.totalorder 0, 0
    // Predicated region
    $region18: #{tpu_custom_call.1} parent=1 // pred_check
      %p61 = pneg %p60
    $region19: #{tpu_custom_call.1} parent=1 // pred_check_branch
      %63 = sbr.rel (%p61) target = $region21
    $region20: #{tpu_custom_call.1} parent=1 // pred_region
      %64 = vst [vmem:[#allocation7] sm:$0xff] 0.0
    $region21: #{tpu_custom_call.1} parent=1 // pred_fallthru
      _
    %v65 = vld [vmem:[#allocation2] sm:$0xff]
    %v66 = vld [vmem:[#allocation2 + $0x8] sm:$0xff]
    %v67 = vld [vmem:[#allocation5] sm:$0xff]
    %v68 = vld [vmem:[#allocation5 + $0x8] sm:$0xff]
    %v69 = vsub.f32 %v65, %v67
    %v70 = vsub.f32 %v66, %v68
    %v71 = vmul.f32 %v69, %v69
    %v72 = vmul.f32 %v70, %v70
    %v73 = vadd.f32 %v71, 1e-06
    %v74 = vadd.f32 %v72, 1e-06
    %v75 = vrsqrt.pop %v73
    %v76 = vmul.f32 %v73, %v75
    %vm77 = vcmp.eq.f32.partialorder %v73, inf
    %v78 = vsel %vm77, %v73, %v76
    %vm79 = vcmp.eq.f32.partialorder %v73, 0.0
    %v80 = vand.u32 %v73, 2147483648
    %v81 = vsel %vm79, %v80, %v78
    %v82 = vrsqrt.pop %v74
    %v83 = vmul.f32 %v74, %v82
    %vm84 = vcmp.eq.f32.partialorder %v74, inf
    %v85 = vsel %vm84, %v74, %v83
    %vm86 = vcmp.eq.f32.partialorder %v74, 0.0
    %v87 = vand.u32 %v74, 2147483648
    %v88 = vsel %vm86, %v87, %v85
    %v89 = vld [vmem:[#allocation7] sm:$0xff]
    %v90 = vadd.f32 %v81, %v88
    %v91 = vadd.f32 %v89, %v90
    %92 = vst [vmem:[#allocation7] sm:$0xff] %v91
    // Predicated region
    $region22: #{tpu_custom_call.1} parent=1 // pred_check
      _
    $region23: #{tpu_custom_call.1} parent=1 // pred_check_branch
      %94 = sbr.rel (0) target = $region25
    $region24: #{tpu_custom_call.1} parent=1 // pred_region
      %s96 = ssub.s32 128, 128
      %97 = vsyncadd [#allocation4], %s96
      %s99 = sshll.u32 [#allocation7], 4
      %s100 = int_to_ptr.vmem [resolvable:$true] %s99
      %102 = dma.vmem_to_hbm [thread:$0]  %s100, 128, %s2, [#allocation4]
    $region25: #{tpu_custom_call.1} parent=1 // pred_fallthru
      _
    // Predicated region
    $region26: #{tpu_custom_call.1} parent=1 // pred_check
      _
    $region27: #{tpu_custom_call.1} parent=1 // pred_check_branch
      %104 = sbr.rel (0) target = $region29
    $region28: #{tpu_custom_call.1} parent=1 // pred_region
      %105 = dma.done [#allocation4], 128
    $region29: #{tpu_custom_call.1} parent=1 // pred_fallthru
      _
    %106 = vsyncpa [#allocation3], 1
    %107 = vsyncpa [#allocation6], 1
    %108 = vsyncpa [#allocation4], 1

</llo_original>
